<compile_context>
chip_gen: v5e
topology: v5e:2x2
jax: 0.10.0
libtpu: 0.0.40
codegen_flags: <defaults>
</compile_context>

<pallas_src>
import functools

import jax
import jax.numpy as jnp
from jax.experimental import pallas as pl
from jax.experimental.pallas import tpu as pltpu

_LANE = 128


def _round_up(x: int, m: int) -> int:
    return ((x + m - 1) // m) * m


def proj_kernel(scale_ref, x_ref, w_ref, bias_ref, o_ref):
    """One (tm, tn) output tile.

    scale_ref : SMEM (1,)          f32  learnable scalar scale
    x_ref     : VMEM (tm, D_in)         raw input rows (native dtype)
    w_ref     : VMEM (D_in, tn)         pre-transposed orthogonal projection
    bias_ref  : VMEM (1, tn)       f32  bias slice
    o_ref     : VMEM (tm, tn)           output tile
    """
    x = x_ref[...]

    # Per-row L2 normalization factor with the scalar scale folded in.
    # (No epsilon: an all-zero row yields inf/NaN, exactly like the PyTorch
    #  reference `x / x.norm(2, -1, keepdim=True)`.)
    xf = x.astype(jnp.float32)
    sq = jnp.sum(xf * xf, axis=-1, keepdims=True)             # [tm, 1]
    inv = jax.lax.rsqrt(sq) * scale_ref[0]                    # [tm, 1]

    # Raw x straight to the MXU; normalization/scale applied to the f32 acc.
    acc = jnp.dot(x, w_ref[...], preferred_element_type=jnp.float32)   # [tm, tn]
    o_ref[...] = (acc * inv + bias_ref[...]).astype(o_ref.dtype)


def prepare_proj_params(proj_w, bias, dtype):
    """One-time prep of the fixed buffers (do NOT call per forward pass).

    proj_w: (D_out, D_in) fixed orthogonal projection.
    bias:   (D_out,)
    Returns (w_t, bias_p): weight transposed to [D_in, pad_dout] in `dtype`,
    bias as f32 [1, pad_dout], both lane-padded to a multiple of 128.
    """
    D_out, _ = proj_w.shape
    pad_dout = _round_up(D_out, _LANE)
    w_t = jnp.asarray(proj_w).T.astype(dtype)                          # [D_in, D_out]
    w_t = jnp.pad(w_t, ((0, 0), (0, pad_dout - D_out)))
    bias_p = jnp.pad(jnp.asarray(bias, jnp.float32),
                     (0, pad_dout - D_out)).reshape(1, pad_dout)
    return w_t, bias_p


def _choose_tiles(B, D_in, pad_dout, dtype_bytes, tm_hint, tn_hint, budget):
    """Pick (tm, tn, footprint) at trace time so the working set fits VMEM."""

    def footprint(tm_, tn_):
        # 2x (double-buffered) x / w / out / bias tiles in the I/O dtype plus an
        # f32 accumulator tile's worth of registers/scratch.
        return (2 * (tm_ * D_in + D_in * tn_ + tm_ * tn_ + tn_) * dtype_bytes
                + 4 * tm_ * tn_)

    if B <= tm_hint:
        tm_cands = [B]                    # full-extent block, exempt from (8,128)
    else:
        tm_cands = [t for t in (tm_hint, 256, 128, 64, 32, 8)
                    if t <= tm_hint] or [8]

    # Preference 1: whole weight resident (single D_out block, weight DMA'd once).
    for tm_ in tm_cands:
        if footprint(tm_, pad_dout) <= budget:
            return tm_, pad_dout, footprint(tm_, pad_dout)

    # Preference 2: tile D_out with the largest 128-multiple divisor of pad_dout
    # that fits under the hint; the D_out axis is outermost so each column block
    # is still resident while x streams.
    m = pad_dout // _LANE
    tn_cands = sorted({_LANE * d for d in range(1, m + 1)
                       if m % d == 0 and _LANE * d <= tn_hint}, reverse=True)
    for tm_ in tm_cands:
        for tn_ in tn_cands:
            if footprint(tm_, tn_) <= budget:
                return tm_, tn_, footprint(tm_, tn_)

    # Last resort: smallest tiles we are willing to use.
    tm_ = tm_cands[-1]
    return tm_, _LANE, footprint(tm_, _LANE)


@functools.partial(jax.jit,
                   static_argnames=("d_out", "tm", "tn", "vmem_budget"))
def proj_forward_prepared(x, w_t, scale, bias_p, *, d_out, tm=512, tn=512,
                          vmem_budget=30 * 1024 * 1024):
    """x: [B, D_in]; w_t: [D_in, pad_dout]; scale: [1]; bias_p: [1, pad_dout]."""
    B, D_in = x.shape
    pad_dout = w_t.shape[1]
    dtype_bytes = jnp.dtype(x.dtype).itemsize

    scale = jnp.asarray(scale, jnp.float32).reshape(1)

    tm_eff, tn_eff, footprint = _choose_tiles(
        B, D_in, pad_dout, dtype_bytes, tm, tn, vmem_budget)

    num_i = pl.cdiv(B, tm_eff)          # batch blocks (innermost: x streams)
    num_j = pad_dout // tn_eff          # output-column blocks (outermost, exact)

    vmem_limit = min(max(footprint + (8 << 20), 32 << 20), 40 << 20)

    out = pl.pallas_call(
        proj_kernel,
        out_shape=jax.ShapeDtypeStruct((B, pad_dout), x.dtype),
        grid=(num_j, num_i),
        in_specs=[
            pl.BlockSpec(memory_space=pltpu.SMEM),                  # scalar scale
            pl.BlockSpec((tm_eff, D_in), lambda j, i: (i, 0)),      # x tile (streams)
            pl.BlockSpec((D_in, tn_eff), lambda j, i: (0, j)),      # weight block (resident over i)
            pl.BlockSpec((1, tn_eff), lambda j, i: (0, j)),         # bias slice (resident over i)
        ],
        out_specs=pl.BlockSpec((tm_eff, tn_eff), lambda j, i: (i, j)),
        compiler_params=pltpu.CompilerParams(
            dimension_semantics=("parallel", "parallel"),
            vmem_limit_bytes=vmem_limit,
        ),
    )(scale, x, w_t, bias_p)

    return out[:, :d_out]


def make_params(input_size, output_size, init_scale=10.0, seed=123):
    """Deterministic synthetic init mirroring Proj.__init__ shapes.

    proj  : (output_size, input_size), orthogonal via QR
    weight: scalar, filled with init_scale
    bias  : (output_size,), zeros
    """
    key = jax.random.PRNGKey(seed)
    a = jax.random.normal(key, (output_size, input_size), dtype=jnp.float32)
    if output_size >= input_size:
        q, _ = jnp.linalg.qr(a)          # (output_size, input_size)
        proj = q
    else:
        q, _ = jnp.linalg.qr(a.T)        # (input_size, output_size)
        proj = q.T
    scale = jnp.array([init_scale], dtype=jnp.float32)
    bias = jnp.zeros((output_size,), dtype=jnp.float32)
    return proj, scale, bias


def proj_reference(x, proj_w, scale, bias):
    xn = x / jnp.linalg.norm(x, axis=-1, keepdims=True)
    return xn @ proj_w.T.astype(x.dtype) * scale[0] + bias[None, :]


if __name__ == "__main__":
    # --- small case: sub-128 dims exercise lane padding of the fixed buffers ---
    B, D_in, D_out = 8, 32, 64
    x = jax.random.normal(jax.random.PRNGKey(0), (B, D_in), dtype=jnp.float32)
    proj_w, scale, bias = make_params(D_in, D_out, init_scale=10.0)

    w_t, bias_p = prepare_proj_params(proj_w, bias, x.dtype)   # one-time prep
    out = jax.block_until_ready(
        proj_forward_prepared(x, w_t, scale, bias_p, d_out=D_out))
    ref = proj_reference(x, proj_w, scale, bias)
    assert out.shape == (B, D_out)
    assert jnp.allclose(out, ref, atol=1e-4, rtol=1e-4), "small case mismatch"

    # --- moderate case: ragged batch, whole-weight-resident single-block path --
    B2, D_in2, D_out2 = 300, 256, 640
    x2 = jax.random.normal(jax.random.PRNGKey(1), (B2, D_in2), dtype=jnp.float32)
    proj_w2, scale2, bias2 = make_params(D_in2, D_out2, init_scale=10.0)
    bias2 = bias2 + 0.5      # non-trivial bias path

    w_t2, bias_p2 = prepare_proj_params(proj_w2, bias2, x2.dtype)
    out2 = jax.block_until_ready(
        proj_forward_prepared(x2, w_t2, scale2, bias_p2, d_out=D_out2))
    ref2 = proj_reference(x2, proj_w2, scale2, bias2)
    assert out2.shape == (B2, D_out2)
    assert jnp.allclose(out2, ref2, atol=1e-3, rtol=1e-3), "moderate mismatch"

    # --- forced multi-tile case: tiny VMEM budget -> streamed x, resident ------
    # --- weight column blocks, partial edge batch block ------------------------
    out3 = jax.block_until_ready(
        proj_forward_prepared(x2, w_t2, scale2, bias_p2, d_out=D_out2,
                              tm=128, tn=512, vmem_budget=1 << 20))
    assert out3.shape == (B2, D_out2)
    assert jnp.allclose(out3, ref2, atol=1e-3, rtol=1e-3), "multi-tile mismatch"

    print("KERNEL_OK")
</pallas_src>

<mosaic_0001>
module attributes {stable_mosaic.version = 11 : i64} {
  func.func @proj_kernel(%arg0: i32, %arg1: i32, %arg2: memref<1xf32, #tpu.memory_space<smem>>, %arg3: memref<8x32xf32, #tpu.memory_space<vmem>>, %arg4: memref<32x128xf32, #tpu.memory_space<vmem>>, %arg5: memref<1x128xf32, #tpu.memory_space<vmem>>, %arg6: memref<8x128xf32, #tpu.memory_space<vmem>>) attributes {dimension_semantics = [#tpu.dimension_semantics<parallel>, #tpu.dimension_semantics<parallel>], iteration_bounds = array<i64: 1, 1>, scalar_prefetch = 0 : i64, scratch_operands = 0 : i64, tpu.core_type = #tpu.core_type<tc>, window_params = [{transform_indices = @transform_0, window_bounds = array<i64: 1>}, {transform_indices = @transform_1, window_bounds = array<i64: 8, 32>}, {transform_indices = @transform_2, window_bounds = array<i64: 32, 128>}, {transform_indices = @transform_3, window_bounds = array<i64: 1, 128>}, {transform_indices = @transform_4, window_bounds = array<i64: 8, 128>}]} {
    %c0 = arith.constant 0 : index
    %c0_0 = arith.constant 0 : index
    %0 = vector.load %arg3[%c0, %c0_0] : memref<8x32xf32, #tpu.memory_space<vmem>>, vector<8x32xf32>
    %1 = arith.mulf %0, %0 : vector<8x32xf32>
    %cst = arith.constant dense<0.000000e+00> : vector<8xf32>
    %2 = vector.multi_reduction <add>, %1, %cst [1] : vector<8x32xf32> to vector<8xf32>
    %3 = vector.shape_cast %2 : vector<8xf32> to vector<8x1xf32>
    %4 = math.rsqrt %3 : vector<8x1xf32>
    %c0_1 = arith.constant 0 : index
    %5 = memref.load %arg2[%c0_1] : memref<1xf32, #tpu.memory_space<smem>>
    %6 = vector.broadcast %5 : f32 to vector<8x1xf32>
    %7 = arith.mulf %4, %6 : vector<8x1xf32>
    %c0_2 = arith.constant 0 : index
    %c0_3 = arith.constant 0 : index
    %8 = vector.load %arg4[%c0_2, %c0_3] : memref<32x128xf32, #tpu.memory_space<vmem>>, vector<32x128xf32>
    %cst_4 = arith.constant dense<0.000000e+00> : vector<8x128xf32>
    %9 = tpu.matmul %0, %8, %cst_4 {dimension_numbers = #tpu.dot_dimension_numbers<[1], [0], [0], [1], [0, 0, 1, 1], [], []>} : vector<8x32xf32>, vector<32x128xf32>, vector<8x128xf32> -> vector<8x128xf32>
    %10 = vector.broadcast %7 : vector<8x1xf32> to vector<8x128xf32>
    %11 = arith.mulf %9, %10 : vector<8x128xf32>
    %c0_5 = arith.constant 0 : index
    %c0_6 = arith.constant 0 : index
    %12 = vector.load %arg5[%c0_5, %c0_6] : memref<1x128xf32, #tpu.memory_space<vmem>>, vector<1x128xf32>
    %13 = vector.broadcast %12 : vector<1x128xf32> to vector<8x128xf32>
    %14 = arith.addf %11, %13 : vector<8x128xf32>
    %c0_7 = arith.constant 0 : index
    %c0_8 = arith.constant 0 : index
    %15 = vector.load %arg6[%c0_7, %c0_8] : memref<8x128xf32, #tpu.memory_space<vmem>>, vector<8x128xf32>
    tpu.vector_store %arg6[%c0_7, %c0_8], %14 {strides = array<i32>} : memref<8x128xf32, #tpu.memory_space<vmem>>, vector<8x128xf32>,
    return
  }
  func.func @transform_0(%arg0: i32, %arg1: i32) -> i32 {
    %c0_i32 = arith.constant 0 : i32
    %c0_i32_0 = arith.constant 0 : i32
    return %c0_i32 : i32
  }
  func.func @transform_1(%arg0: i32, %arg1: i32) -> (i32, i32) {
    %c0_i32 = arith.constant 0 : i32
    %c0_i32_0 = arith.constant 0 : i32
    return %arg1, %c0_i32 : i32, i32
  }
  func.func @transform_2(%arg0: i32, %arg1: i32) -> (i32, i32) {
    %c0_i32 = arith.constant 0 : i32
    %c0_i32_0 = arith.constant 0 : i32
    return %c0_i32, %arg0 : i32, i32
  }
  func.func @transform_3(%arg0: i32, %arg1: i32) -> (i32, i32) {
    %c0_i32 = arith.constant 0 : i32
    %c0_i32_0 = arith.constant 0 : i32
    return %c0_i32, %arg0 : i32, i32
  }
  func.func @transform_4(%arg0: i32, %arg1: i32) -> (i32, i32) {
    %c0_i32 = arith.constant 0 : i32
    return %arg1, %arg0 : i32, i32
  }
}

</mosaic_0001>

<llo_original>
// kernel: proj_forward_prepared.1
$region0: #{proj_forward_prepared.1}
  #allocation0 [shape = 'u32[]', space=smem, size = 0x4, offset = 0x4, fixed_abs, tag = 'smem constant byte address 0x4 - core index']
  #allocation1 [shape = 'u32[72,128]{1,0:T(1,128)}', space=vmem, size = 0x9000, scoped, tag = 'internal scratch']
  #allocation2 [shape = 'f32[1]{0:T(128)S(6)}', space=smem, size = 0x200, scoped, tag = 'scoped memory for proj_forward_prepared.1']
  %s0 = inlined_call_operand.<no memory space> [shape: f32[1], index: 0, kind: input, shape index: {}]
  %s1 = inlined_call_operand.hbm [shape: f32[8,32], index: 1, kind: input, shape index: {}]
  %s2 = inlined_call_operand.hbm [shape: f32[32,128], index: 2, kind: input, shape index: {}]
  %s3 = inlined_call_operand.vmem [shape: f32[1,128], index: 3, kind: input, shape index: {}]
  %s4 = inlined_call_operand.hbm [shape: f32[8,128], index: 4, kind: output, shape index: {}]
  %s5 = sld [smem:[#allocation0]]
  $region34: #{proj_forward_prepared.1} parent=0
    _
  %s7 = ssub.s32 1, %s5
  %s8 = scalar_select 0, %s7, %s5
  %9 = sst [smem:[#allocation2]] %s0
  $region1: #{proj_forward_prepared.1} parent=0
    #allocation3 [shape = 'u8[4096]{0}', space=vmem, size = 0x1000, scoped, tag = 'input window, operand 1, single buffered']
    #allocation4 [shape = 's32[1]{0}', space=sflag, size = 0x4, scoped, tag = 'scoped memory for proj_forward_prepared.1']
    #allocation5 [shape = 's32[1]{0}', space=sflag, size = 0x4, scoped, tag = 'scoped memory for proj_forward_prepared.1']
    #allocation6 [shape = 'u8[16384]{0}', space=vmem, size = 0x4000, scoped, tag = 'input window, operand 2, single buffered']
    #allocation7 [shape = 's32[1]{0}', space=sflag, size = 0x4, scoped, tag = 'scoped memory for proj_forward_prepared.1']
    #allocation8 [shape = 'u8[4096]{0}', space=vmem, size = 0x1000, scoped, tag = 'output window, operand 0, single buffered']
    %10 = vsyncpa [#allocation4], 0
    %11 = vsyncpa [#allocation7], 0
    %12 = vsyncpa [#allocation5], 0
    // Predicated region
    $region2: #{proj_forward_prepared.1} parent=1 // pred_check
      _
    $region3: #{proj_forward_prepared.1} parent=1 // pred_check_branch
      %14 = sbr.rel (0) target = $region5
    $region4: #{proj_forward_prepared.1} parent=1 // pred_region
      _
    $region5: #{proj_forward_prepared.1} parent=1 // pred_fallthru
      _
    // Predicated region
    $region6: #{proj_forward_prepared.1} parent=1 // pred_check
      _
    $region7: #{proj_forward_prepared.1} parent=1 // pred_check_branch
      %16 = sbr.rel (0) target = $region9
    $region8: #{proj_forward_prepared.1} parent=1 // pred_region
      %18 = vsyncadd [#allocation4], 0
      %s20 = sshll.u32 %s1, 4
      %s21 = int_to_ptr.hbm [resolvable:$true] %s20
      %s22 = sshll.u32 [#allocation3], 4
      %s23 = int_to_ptr.vmem [resolvable:$true] %s22
      %25 = dma.hbm_to_vmem [thread:$0]  %s21, 128, %s23, [#allocation4]
    $region9: #{proj_forward_prepared.1} parent=1 // pred_fallthru
      _
    // Predicated region
    $region10: #{proj_forward_prepared.1} parent=1 // pred_check
      _
    $region11: #{proj_forward_prepared.1} parent=1 // pred_check_branch
      %27 = sbr.rel (0) target = $region13
    $region12: #{proj_forward_prepared.1} parent=1 // pred_region
      %29 = vsyncadd [#allocation7], 0
      %s30 = sshll.u32 %s2, 4
      %s31 = int_to_ptr.hbm [resolvable:$true] %s30
      %s32 = sshll.u32 [#allocation6], 4
      %s33 = int_to_ptr.vmem [resolvable:$true] %s32
      %38 = dma.hbm_to_vmem [thread:$0]  %s31, 512, %s33, [#allocation7], 128, 128, 8
    $region13: #{proj_forward_prepared.1} parent=1 // pred_fallthru
      _
    // Predicated region
    $region14: #{proj_forward_prepared.1} parent=1 // pred_check
      _
    $region15: #{proj_forward_prepared.1} parent=1 // pred_check_branch
      %40 = sbr.rel (0) target = $region17
    $region16: #{proj_forward_prepared.1} parent=1 // pred_region
      _
    $region17: #{proj_forward_prepared.1} parent=1 // pred_fallthru
      _
    // Predicated region
    $region18: #{proj_forward_prepared.1} parent=1 // pred_check
      _
    $region19: #{proj_forward_prepared.1} parent=1 // pred_check_branch
      %42 = sbr.rel (0) target = $region21
    $region20: #{proj_forward_prepared.1} parent=1 // pred_region
      %44 = dma.done [#allocation4], 128
    $region21: #{proj_forward_prepared.1} parent=1 // pred_fallthru
      _
    // Predicated region
    $region22: #{proj_forward_prepared.1} parent=1 // pred_check
      _
    $region23: #{proj_forward_prepared.1} parent=1 // pred_check_branch
      %46 = sbr.rel (0) target = $region25
    $region24: #{proj_forward_prepared.1} parent=1 // pred_region
      %48 = dma.done [#allocation7], 512
    $region25: #{proj_forward_prepared.1} parent=1 // pred_fallthru
      _
    %v49 = vld [vmem:[#allocation3] sm:$0xff]
    %v50 = vmul.f32 %v49, %v49
    %vm51 = vcmask 261120
    %v52 = vsel %vm51, %v50, 0.0
    %53 = vadd.xlane.f32.xlu0 %v52
    %v54 = vpop.xlane.xlu0 %53
    %v55 = vrsqrt.pop %v54
    %v56 = vmul.f32 %v55, %v54
    %v57 = vmul.f32 %v56, %v55
    %v58 = vmul.f32 0.5, %v57
    %v59 = vsub.f32 1.5, %v58
    %v60 = vmul.f32 %v55, %v59
    %vm61 = vweird.f32 %v54
    %vm62 = vweird.f32 %v55
    %vm63 = vmor %vm61, %vm62
    %v64 = vsel %vm63, %v55, %v60
    %s65 = sld [smem:[#allocation2]]
    %v66 = vstv %s65
    %v67 = vmul.f32 %v64, %v66
    %v68 = vld [vmem:[#allocation6] sm:$0xff]
    %v69 = vld [vmem:[#allocation6 + $0x8] sm:$0xff]
    %v70 = vld [vmem:[#allocation6 + $0x10] sm:$0xff]
    %v71 = vld [vmem:[#allocation6 + $0x18] sm:$0xff]
    %v73 = vsel %vm51, %v49, 0
    %75 = vmatpush.msra.mxu0 0.0
    %76 = vmatpush.msra.mxu0 0.0
    %77 = vmatpush.msra.mxu0 0.0
    %78 = vmatpush.msra.mxu0 0.0
    %79 = vmatpush.msra.mxu0 0.0
    %80 = vmatpush.msra.mxu0 0.0
    %81 = vmatpush.msra.mxu0 0.0
    %82 = vmatpush.msra.mxu0 0.0
    %83 = vmatpush.msra.mxu0 0.0
    %84 = vmatpush.msra.mxu0 0.0
    %85 = vmatpush.msra.mxu0 0.0
    %86 = vmatpush.msra.mxu0 0.0
    %87 = vmatpush.msra.mxu0 %v71
    %88 = vmatpush.msra.mxu0 %v70
    %89 = vmatpush.msra.mxu0 %v69
    %90 = vmatpush.msra.mxu0 %v68
    %91 = vmatmul.f32.gmra.mxu0 %v73
    %v92 = vpop.f32.mrf.mxu0
    %v93 = vadd.f32 0.0, %v92
    %94 = vdwg.mxu0
    %v95 = vmul.f32 %v93, %v67
    %v96 = vld [vmem:[%s3] sm:$0x1]
    %v98 = vperm.slane %v96, 0
    %v100 = vadd.f32 %v95, %v98
    %101 = vst [vmem:[#allocation8] sm:$0xff] %v100
    // Predicated region
    $region26: #{proj_forward_prepared.1} parent=1 // pred_check
      _
    $region27: #{proj_forward_prepared.1} parent=1 // pred_check_branch
      %103 = sbr.rel (0) target = $region29
    $region28: #{proj_forward_prepared.1} parent=1 // pred_region
      %105 = vsyncadd [#allocation5], 0
      %s107 = sshll.u32 [#allocation8], 4
      %s108 = int_to_ptr.vmem [resolvable:$true] %s107
      %s109 = sshll.u32 %s4, 4
      %s110 = int_to_ptr.hbm [resolvable:$true] %s109
      %112 = dma.vmem_to_hbm [thread:$0]  %s108, 128, %s110, [#allocation5]
    $region29: #{proj_forward_prepared.1} parent=1 // pred_fallthru
      _
    // Predicated region
    $region30: #{proj_forward_prepared.1} parent=1 // pred_check
      _
    $region31: #{proj_forward_prepared.1} parent=1 // pred_check_branch
      %114 = sbr.rel (0) target = $region33
    $region32: #{proj_forward_prepared.1} parent=1 // pred_region
      %116 = dma.done [#allocation5], 128
    $region33: #{proj_forward_prepared.1} parent=1 // pred_fallthru
      _
    %117 = vsyncpa [#allocation4], 1
    %118 = vsyncpa [#allocation7], 1
    %119 = vsyncpa [#allocation5], 1

</llo_original>
